<compile_context>
chip_gen: v7x
topology: tpu7x:2x2x1
jax: 0.10.0
libtpu: 0.0.40
codegen_flags: <defaults>
</compile_context>

<pallas_src>
import math
from functools import partial

import jax
import jax.numpy as jnp
from jax.experimental import pallas as pl
from jax.experimental.pallas import tpu as pltpu

NUM_STATES = 4     # env.observation_space.shape[0] for a small continuous-control env
HIDDEN = 100       # logical hidden width of fc1
LANE = 128


def _round_up(x, m):
    return ((x + m - 1) // m) * m


def critic_kernel(xt_ref, w1t_ref, b1_ref, w2_ref, b2_ref, out_ref, *, chunk):
    """One batch tile of the critic forward pass, transposed (lane-dense) form.

    xt_ref : (S, TB)        state tile, transposed
    w1t_ref: (HP, S)        fc1 weight, transposed, hidden dim zero-padded to HP=128
    b1_ref : (HP, 1)        fc1 bias column (zero-padded)
    w2_ref : (1, HP)        fc2 weight row (zero-padded)
    b2_ref : (1, 1)  SMEM   fc2 bias scalar
    out_ref: (1, TB)        value row (lane-dense output)
    """
    hp = w1t_ref.shape[0]
    tb = out_ref.shape[1]

    w1t = w1t_ref[...]                                   # (HP, S)   resident, tiny
    w2r = w2_ref[...]                                    # (1, HP)   resident
    b1b = jnp.broadcast_to(b1_ref[...], (hp, chunk))     # (HP, CH)  hoisted once
    b2 = b2_ref[0, 0]                                    # scalar from SMEM

    # Static, fully-unrolled loop over `chunk`-lane slices of the batch tile.
    # Each slice keeps a ~32-vreg working set -> no VMEM spill round-trips.
    for c in range(tb // chunk):
        off = c * chunk                                  # static offset
        x = xt_ref[:, pl.ds(off, chunk)]                 # (S, CH)
        # fc1 on the MXU (K = NUM_STATES), f32 accumulation.
        h = jnp.dot(w1t, x, preferred_element_type=jnp.float32)      # (HP, CH)
        # bias + ReLU on the VPU (only elementwise work left).
        h = jnp.maximum(h + b1b, 0.0)
        # fc2 on the MXU as a (1, HP) x (HP, CH) dot -> lane-dense row.
        v = jnp.dot(w2r, h, preferred_element_type=jnp.float32)      # (1, CH)
        out_ref[:, pl.ds(off, chunk)] = (v + b2).astype(out_ref.dtype)


def critic_forward(state, w1, b1, w2, b2, *, tile_b=4096, chunk=256):
    """state: (B, NUM_STATES); w1: (NUM_STATES, H); b1: (H,); w2: (H, 1); b2: (1,).
    Returns (B, 1) values, matching the PyTorch Critic forward."""
    B, S = state.shape
    H = w1.shape[1]
    HP = _round_up(H, LANE)                              # 100 -> 128
    assert tile_b % chunk == 0 and chunk % LANE == 0

    # Zero-pad the hidden dim; padded rows of w1/b1/w2 are zero so the padded
    # hidden units contribute exactly 0 after ReLU * w2.
    w1t = jnp.zeros((HP, S), jnp.float32).at[:H, :].set(w1.T.astype(jnp.float32))
    b1c = jnp.zeros((HP, 1), jnp.float32).at[:H, 0].set(b1.astype(jnp.float32))
    w2r = jnp.zeros((1, HP), jnp.float32).at[0, :H].set(w2[:, 0].astype(jnp.float32))
    b2s = b2.reshape(1, 1).astype(jnp.float32)

    # Batch tiling: large lane-dense tiles; keep >= 2 grid steps when the batch
    # is big enough so dual-TC sharding (v7x) actually kicks in.
    Bp0 = _round_up(B, chunk)
    TB = min(tile_b, Bp0)
    if Bp0 // TB < 2 and Bp0 >= 2 * chunk:
        TB = _round_up(Bp0 // 2, chunk)
    Bp = _round_up(B, TB)

    # Lane-dense (S, Bp) view: a transpose plus (only if needed) a pad — no
    # zeros+scatter materialization pass.
    xt = state.astype(jnp.float32).T
    if Bp != B:
        xt = jnp.pad(xt, ((0, 0), (0, Bp - B)))

    out = pl.pallas_call(
        partial(critic_kernel, chunk=chunk),
        out_shape=jax.ShapeDtypeStruct((1, Bp), jnp.float32),
        grid=(Bp // TB,),
        in_specs=[
            pl.BlockSpec((S, TB), lambda i: (0, i)),            # state tile (streams over batch)
            pl.BlockSpec((HP, S), lambda i: (0, 0)),            # w1^T   (stays resident)
            pl.BlockSpec((HP, 1), lambda i: (0, 0)),            # b1     (stays resident)
            pl.BlockSpec((1, HP), lambda i: (0, 0)),            # w2 row (stays resident)
            pl.BlockSpec(memory_space=pltpu.MemorySpace.SMEM),  # b2 scalar
        ],
        out_specs=pl.BlockSpec((1, TB), lambda i: (0, i)),
        compiler_params=pltpu.CompilerParams(
            dimension_semantics=("parallel",),   # v7x: shard batch tiles across both TCs
        ),
        cost_estimate=pl.CostEstimate(
            flops=2 * Bp * HP * (S + 1),
            transcendentals=0,
            bytes_accessed=4 * (Bp * S + Bp + HP * (S + 2) + 1),
        ),
    )(xt, w1t, b1c, w2r, b2s)

    # Padded batch columns (B..Bp) hold garbage (ReLU(b1)·w2 + b2); they are
    # discarded here and must never be reduced over upstream.
    return out[0, :B].reshape(B, 1)


def init_params(key):
    # Deterministic init mimicking PyTorch nn.Linear default:
    # U(-1/sqrt(fan_in), 1/sqrt(fan_in)) for both weight and bias.
    k1, k2, k3, k4 = jax.random.split(key, 4)
    bound1 = 1.0 / math.sqrt(NUM_STATES)
    bound2 = 1.0 / math.sqrt(HIDDEN)
    w1 = jax.random.uniform(k1, (NUM_STATES, HIDDEN), jnp.float32, -bound1, bound1)
    b1 = jax.random.uniform(k2, (HIDDEN,), jnp.float32, -bound1, bound1)
    w2 = jax.random.uniform(k3, (HIDDEN, 1), jnp.float32, -bound2, bound2)
    b2 = jax.random.uniform(k4, (1,), jnp.float32, -bound2, bound2)
    return w1, b1, w2, b2


if __name__ == "__main__":
    key = jax.random.PRNGKey(0)
    pkey, xkey = jax.random.split(key)
    w1, b1, w2, b2 = init_params(pkey)

    batch = 8
    state = jax.random.normal(xkey, (batch, NUM_STATES), jnp.float32)

    value = critic_forward(state, w1, b1, w2, b2)
    value = jax.block_until_ready(value)

    # Reference in plain JAX with explicit high-precision dots (same math as
    # the PyTorch forward).
    h_ref = jnp.maximum(jnp.dot(state, w1, precision="highest") + b1, 0.0)
    ref = jnp.dot(h_ref, w2, precision="highest") + b2

    assert value.shape == (batch, 1)
    # Tolerance leaves headroom for possible reduced-precision MXU passes on
    # f32 operands; the kernel math itself matches the PyTorch forward exactly.
    assert jnp.allclose(value, ref, atol=1e-2, rtol=1e-2), float(
        jnp.max(jnp.abs(value - ref)))

    print("KERNEL_OK")
</pallas_src>

<mosaic_0001>
module attributes {stable_mosaic.version = 11 : i64} {
  func.func @critic_kernel(%arg0: i32, %arg1: memref<4x256xf32, #tpu.memory_space<vmem>>, %arg2: memref<128x4xf32, #tpu.memory_space<vmem>>, %arg3: memref<128x1xf32, #tpu.memory_space<vmem>>, %arg4: memref<1x128xf32, #tpu.memory_space<vmem>>, %arg5: memref<1x1xf32, #tpu.memory_space<smem>>, %arg6: memref<1x256xf32, #tpu.memory_space<vmem>>) attributes {dimension_semantics = [#tpu.dimension_semantics<parallel>], iteration_bounds = array<i64: 1>, scalar_prefetch = 0 : i64, scratch_operands = 0 : i64, tpu.core_type = #tpu.core_type<tc>, window_params = [{transform_indices = @transform_0, window_bounds = array<i64: 4, 256>}, {pipeline_mode = #tpu.pipeline_mode<synchronous>, transform_indices = @transform_1, window_bounds = array<i64: 128, 4>}, {pipeline_mode = #tpu.pipeline_mode<synchronous>, transform_indices = @transform_2, window_bounds = array<i64: 128, 1>}, {pipeline_mode = #tpu.pipeline_mode<synchronous>, transform_indices = @transform_3, window_bounds = array<i64: 1, 128>}, {transform_indices = @transform_4, window_bounds = array<i64: 1, 1>}, {transform_indices = @transform_5, window_bounds = array<i64: 1, 256>}]} {
    %c0 = arith.constant 0 : index
    %c0_0 = arith.constant 0 : index
    %0 = vector.load %arg2[%c0, %c0_0] : memref<128x4xf32, #tpu.memory_space<vmem>>, vector<128x4xf32>
    %c0_1 = arith.constant 0 : index
    %c0_2 = arith.constant 0 : index
    %1 = vector.load %arg4[%c0_1, %c0_2] : memref<1x128xf32, #tpu.memory_space<vmem>>, vector<1x128xf32>
    %c0_3 = arith.constant 0 : index
    %c0_4 = arith.constant 0 : index
    %2 = vector.load %arg3[%c0_3, %c0_4] : memref<128x1xf32, #tpu.memory_space<vmem>>, vector<128x1xf32>
    %3 = vector.shape_cast %2 : vector<128x1xf32> to vector<128x1xf32>
    %4 = vector.broadcast %3 : vector<128x1xf32> to vector<128x256xf32>
    %c0_5 = arith.constant 0 : index
    %c0_6 = arith.constant 0 : index
    %5 = memref.load %arg5[%c0_5, %c0_6] : memref<1x1xf32, #tpu.memory_space<smem>>
    %c0_7 = arith.constant 0 : index
    %c0_8 = arith.constant 0 : index
    %6 = vector.load %arg1[%c0_7, %c0_8] : memref<4x256xf32, #tpu.memory_space<vmem>>, vector<4x256xf32>
    %cst = arith.constant dense<0.000000e+00> : vector<128x256xf32>
    %7 = tpu.matmul %0, %6, %cst {dimension_numbers = #tpu.dot_dimension_numbers<[1], [0], [0], [1], [0, 0, 1, 1], [], []>} : vector<128x4xf32>, vector<4x256xf32>, vector<128x256xf32> -> vector<128x256xf32>
    %8 = arith.addf %7, %4 : vector<128x256xf32>
    %cst_9 = arith.constant 0.000000e+00 : f32
    %9 = vector.broadcast %cst_9 : f32 to vector<128x256xf32>
    %10 = arith.maximumf %8, %9 : vector<128x256xf32>
    %cst_10 = arith.constant dense<0.000000e+00> : vector<1x256xf32>
    %11 = tpu.matmul %1, %10, %cst_10 {dimension_numbers = #tpu.dot_dimension_numbers<[1], [0], [0], [1], [0, 0, 1, 1], [], []>} : vector<1x128xf32>, vector<128x256xf32>, vector<1x256xf32> -> vector<1x256xf32>
    %12 = vector.broadcast %5 : f32 to vector<1x256xf32>
    %13 = arith.addf %11, %12 : vector<1x256xf32>
    %c0_11 = arith.constant 0 : index
    %c0_12 = arith.constant 0 : index
    %14 = vector.load %arg6[%c0_11, %c0_12] : memref<1x256xf32, #tpu.memory_space<vmem>>, vector<1x256xf32>
    tpu.vector_store %arg6[%c0_11, %c0_12], %13 {strides = array<i32>} : memref<1x256xf32, #tpu.memory_space<vmem>>, vector<1x256xf32>,
    return
  }
  func.func @transform_0(%arg0: i32) -> (i32, i32) {
    %c0_i32 = arith.constant 0 : i32
    %c0_i32_0 = arith.constant 0 : i32
    return %c0_i32, %arg0 : i32, i32
  }
  func.func @transform_1(%arg0: i32) -> (i32, i32) {
    %c0_i32 = arith.constant 0 : i32
    %c0_i32_0 = arith.constant 0 : i32
    %c0_i32_1 = arith.constant 0 : i32
    return %c0_i32, %c0_i32_0 : i32, i32
  }
  func.func @transform_2(%arg0: i32) -> (i32, i32) {
    %c0_i32 = arith.constant 0 : i32
    %c0_i32_0 = arith.constant 0 : i32
    %c0_i32_1 = arith.constant 0 : i32
    return %c0_i32, %c0_i32_0 : i32, i32
  }
  func.func @transform_3(%arg0: i32) -> (i32, i32) {
    %c0_i32 = arith.constant 0 : i32
    %c0_i32_0 = arith.constant 0 : i32
    %c0_i32_1 = arith.constant 0 : i32
    return %c0_i32, %c0_i32_0 : i32, i32
  }
  func.func @transform_4(%arg0: i32) -> (i32, i32) {
    %c0_i32 = arith.constant 0 : i32
    %c0_i32_0 = arith.constant 0 : i32
    %c0_i32_1 = arith.constant 0 : i32
    return %c0_i32, %c0_i32_0 : i32, i32
  }
  func.func @transform_5(%arg0: i32) -> (i32, i32) {
    %c0_i32 = arith.constant 0 : i32
    %c0_i32_0 = arith.constant 0 : i32
    return %c0_i32, %arg0 : i32, i32
  }
}

</mosaic_0001>

<llo_original>
// kernel: tpu_custom_call.1
$region0: #{tpu_custom_call.1}
  #allocation0 [shape = 'u32[]', space=smem, size = 0x4, offset = 0x4, fixed_abs, tag = 'smem constant byte address 0x4 - core index']
  #allocation1 [shape = 'u32[144,128]{1,0:T(1,128)}', space=vmem, size = 0x12000, scoped, tag = 'internal scratch']
  #allocation2 [shape = 'f32[1,1]{1,0:T(1,128)S(6)}', space=smem, size = 0x200, scoped, tag = 'scoped memory for tpu_custom_call.1']
  %s0 = inlined_call_operand.vmem [shape: f32[4,256], index: 0, kind: input, shape index: {}]
  %s1 = inlined_call_operand.vmem [shape: f32[128,4], index: 1, kind: input, shape index: {}]
  %s2 = inlined_call_operand.vmem [shape: f32[128,1], index: 2, kind: input, shape index: {}]
  %s3 = inlined_call_operand.vmem [shape: f32[1,128], index: 3, kind: input, shape index: {}]
  %s4 = inlined_call_operand.<no memory space> [shape: f32[1,1], index: 4, kind: input, shape index: {}]
  %s5 = inlined_call_operand.hbm [shape: f32[1,256], index: 5, kind: output, shape index: {}]
  %s6 = sld [smem:[#allocation0]]
  $region30: #{tpu_custom_call.1} parent=0
    _
  %s8 = ssub.s32 1, %s6
  %s9 = scalar_select 0, %s8, %s6
  %10 = sst [smem:[#allocation2]] %s4
  $region1: #{tpu_custom_call.1} parent=0
    #allocation3 [shape = 'u8[1024]{0}', space=vmem, size = 0x400, scoped, tag = 'output window, operand 0, single buffered']
    #allocation4 [shape = 's32[1]{0}', space=sflag, size = 0x4, scoped, tag = 'scoped memory for tpu_custom_call.1']
    %11 = vsyncpa [#allocation4], 0
    // Predicated region
    $region2: #{tpu_custom_call.1} parent=1 // pred_check
      _
    $region3: #{tpu_custom_call.1} parent=1 // pred_check_branch
      %13 = sbr.rel (0) target = $region5
    $region4: #{tpu_custom_call.1} parent=1 // pred_region
      _
    $region5: #{tpu_custom_call.1} parent=1 // pred_fallthru
      _
    // Predicated region
    $region6: #{tpu_custom_call.1} parent=1 // pred_check
      _
    $region7: #{tpu_custom_call.1} parent=1 // pred_check_branch
      %15 = sbr.rel (0) target = $region9
    $region8: #{tpu_custom_call.1} parent=1 // pred_region
      _
    $region9: #{tpu_custom_call.1} parent=1 // pred_fallthru
      _
    // Predicated region
    $region10: #{tpu_custom_call.1} parent=1 // pred_check
      _
    $region11: #{tpu_custom_call.1} parent=1 // pred_check_branch
      %17 = sbr.rel (0) target = $region13
    $region12: #{tpu_custom_call.1} parent=1 // pred_region
      _
    $region13: #{tpu_custom_call.1} parent=1 // pred_fallthru
      _
    // Predicated region
    $region14: #{tpu_custom_call.1} parent=1 // pred_check
      _
    $region15: #{tpu_custom_call.1} parent=1 // pred_check_branch
      %19 = sbr.rel (0) target = $region17
    $region16: #{tpu_custom_call.1} parent=1 // pred_region
      _
    $region17: #{tpu_custom_call.1} parent=1 // pred_fallthru
      _
    // Predicated region
    $region18: #{tpu_custom_call.1} parent=1 // pred_check
      _
    $region19: #{tpu_custom_call.1} parent=1 // pred_check_branch
      %21 = sbr.rel (0) target = $region21
    $region20: #{tpu_custom_call.1} parent=1 // pred_region
      _
    $region21: #{tpu_custom_call.1} parent=1 // pred_fallthru
      _
    %v22 = vld [vmem:[%s1] sm:$0xff]
    %v23 = vld [vmem:[%s1 + $0x8] sm:$0xff]
    %v24 = vld [vmem:[%s1 + $0x10] sm:$0xff]
    %v25 = vld [vmem:[%s1 + $0x18] sm:$0xff]
    %v26 = vld [vmem:[%s1 + $0x20] sm:$0xff]
    %v27 = vld [vmem:[%s1 + $0x28] sm:$0xff]
    %v28 = vld [vmem:[%s1 + $0x30] sm:$0xff]
    %v29 = vld [vmem:[%s1 + $0x38] sm:$0xff]
    %v30 = vld [vmem:[%s1 + $0x40] sm:$0xff]
    %v31 = vld [vmem:[%s1 + $0x48] sm:$0xff]
    %v32 = vld [vmem:[%s1 + $0x50] sm:$0xff]
    %v33 = vld [vmem:[%s1 + $0x58] sm:$0xff]
    %v34 = vld [vmem:[%s1 + $0x60] sm:$0xff]
    %v35 = vld [vmem:[%s1 + $0x68] sm:$0xff]
    %v36 = vld [vmem:[%s1 + $0x70] sm:$0xff]
    %v37 = vld [vmem:[%s1 + $0x78] sm:$0xff]
    %v38 = vld [vmem:[%s3] sm:$0x1]
    %v39 = vld [vmem:[%s2] sm:$0xff]
    %v40 = vld [vmem:[%s2 + $0x8] sm:$0xff]
    %v41 = vld [vmem:[%s2 + $0x10] sm:$0xff]
    %v42 = vld [vmem:[%s2 + $0x18] sm:$0xff]
    %v43 = vld [vmem:[%s2 + $0x20] sm:$0xff]
    %v44 = vld [vmem:[%s2 + $0x28] sm:$0xff]
    %v45 = vld [vmem:[%s2 + $0x30] sm:$0xff]
    %v46 = vld [vmem:[%s2 + $0x38] sm:$0xff]
    %v47 = vld [vmem:[%s2 + $0x40] sm:$0xff]
    %v48 = vld [vmem:[%s2 + $0x48] sm:$0xff]
    %v49 = vld [vmem:[%s2 + $0x50] sm:$0xff]
    %v50 = vld [vmem:[%s2 + $0x58] sm:$0xff]
    %v51 = vld [vmem:[%s2 + $0x60] sm:$0xff]
    %v52 = vld [vmem:[%s2 + $0x68] sm:$0xff]
    %v53 = vld [vmem:[%s2 + $0x70] sm:$0xff]
    %v54 = vld [vmem:[%s2 + $0x78] sm:$0xff]
    %56 = vset.pattern.permute.xlu0 0
    %57 = vperm.xlu0 %56, %v39
    %v58 = vpop.permute.xlu0 %57
    %61 = vset.pattern.permute.xlu0 0
    %62 = vperm.xlu0 %61, %v40
    %v63 = vpop.permute.xlu0 %62
    %66 = vset.pattern.permute.xlu0 0
    %67 = vperm.xlu0 %66, %v41
    %v68 = vpop.permute.xlu0 %67
    %71 = vset.pattern.permute.xlu0 0
    %72 = vperm.xlu0 %71, %v42
    %v73 = vpop.permute.xlu0 %72
    %76 = vset.pattern.permute.xlu0 0
    %77 = vperm.xlu0 %76, %v43
    %v78 = vpop.permute.xlu0 %77
    %81 = vset.pattern.permute.xlu0 0
    %82 = vperm.xlu0 %81, %v44
    %v83 = vpop.permute.xlu0 %82
    %86 = vset.pattern.permute.xlu0 0
    %87 = vperm.xlu0 %86, %v45
    %v88 = vpop.permute.xlu0 %87
    %91 = vset.pattern.permute.xlu0 0
    %92 = vperm.xlu0 %91, %v46
    %v93 = vpop.permute.xlu0 %92
    %96 = vset.pattern.permute.xlu0 0
    %97 = vperm.xlu0 %96, %v47
    %v98 = vpop.permute.xlu0 %97
    %101 = vset.pattern.permute.xlu0 0
    %102 = vperm.xlu0 %101, %v48
    %v103 = vpop.permute.xlu0 %102
    %106 = vset.pattern.permute.xlu0 0
    %107 = vperm.xlu0 %106, %v49
    %v108 = vpop.permute.xlu0 %107
    %111 = vset.pattern.permute.xlu0 0
    %112 = vperm.xlu0 %111, %v50
    %v113 = vpop.permute.xlu0 %112
    %116 = vset.pattern.permute.xlu0 0
    %117 = vperm.xlu0 %116, %v51
    %v118 = vpop.permute.xlu0 %117
    %121 = vset.pattern.permute.xlu0 0
    %122 = vperm.xlu0 %121, %v52
    %v123 = vpop.permute.xlu0 %122
    %126 = vset.pattern.permute.xlu0 0
    %127 = vperm.xlu0 %126, %v53
    %v128 = vpop.permute.xlu0 %127
    %131 = vset.pattern.permute.xlu0 0
    %132 = vperm.xlu0 %131, %v54
    %v133 = vpop.permute.xlu0 %132
    %s135 = sld [smem:[#allocation2]]
    %v136 = vld [vmem:[%s0] sm:$0xff]
    %v138 = vcombine.high %v136, %v136
    %vm139 = vcmask 31744
    %v141 = vsel %vm139, %v22, 0
    %v144 = vsel %vm139, %v23, 0
    %v147 = vsel %vm139, %v24, 0
    %v150 = vsel %vm139, %v25, 0
    %v153 = vsel %vm139, %v26, 0
    %v156 = vsel %vm139, %v27, 0
    %v159 = vsel %vm139, %v28, 0
    %v162 = vsel %vm139, %v29, 0
    %v165 = vsel %vm139, %v30, 0
    %v168 = vsel %vm139, %v31, 0
    %v171 = vsel %vm139, %v32, 0
    %v174 = vsel %vm139, %v33, 0
    %v177 = vsel %vm139, %v34, 0
    %v180 = vsel %vm139, %v35, 0
    %v183 = vsel %vm139, %v36, 0
    %v186 = vsel %vm139, %v37, 0
    %vm188 = vcmask 1043456
    %v189 = vsel %vm188, %v136, 0
    %v191 = vsel %vm188, %v138, 0
    %193 = vmatprep.subr.mxu0 %v191
    %194 = vmatpush1.msra.mxu0 %v189
    %195 = vmatprep.subr.mxu0 0.0
    %196 = vmatpush1.msra.mxu0 0.0
    %197 = vmatprep.subr.mxu0 0.0
    %198 = vmatpush1.msra.mxu0 0.0
    %199 = vmatprep.subr.mxu0 0.0
    %200 = vmatpush1.msra.mxu0 0.0
    %201 = vmatprep.subr.mxu0 0.0
    %202 = vmatpush1.msra.mxu0 0.0
    %203 = vmatprep.subr.mxu0 0.0
    %204 = vmatpush1.msra.mxu0 0.0
    %205 = vmatprep.subr.mxu0 0.0
    %206 = vmatpush1.msra.mxu0 0.0
    %207 = vmatprep.subr.mxu0 0.0
    %208 = vmatpush1.msra.mxu0 0.0
    %209 = vmatprep.subr.mxu0 0.0
    %210 = vmatpush1.msra.mxu0 0.0
    %211 = vmatprep.subr.mxu0 0.0
    %212 = vmatpush1.msra.mxu0 0.0
    %213 = vmatprep.subr.mxu0 0.0
    %214 = vmatpush1.msra.mxu0 0.0
    %215 = vmatprep.subr.mxu0 0.0
    %216 = vmatpush1.msra.mxu0 0.0
    %217 = vmatprep.subr.mxu0 0.0
    %218 = vmatpush1.msra.mxu0 0.0
    %219 = vmatprep.subr.mxu0 0.0
    %220 = vmatpush1.msra.mxu0 0.0
    %221 = vmatprep.subr.mxu0 0.0
    %222 = vmatpush1.msra.mxu0 0.0
    %223 = vmatprep.subr.mxu0 0.0
    %224 = vmatpush1.msra.mxu0 0.0
    %225 = vmatprep.subr.mxu0 0.0
    %226 = vmatpush1.msra.mxu0 0.0
    %227 = vmatprep.subr.mxu0 0.0
    %228 = vmatpush1.msra.mxu0 0.0
    %229 = vmatprep.subr.mxu0 0.0
    %230 = vmatpush1.msra.mxu0 0.0
    %231 = vmatprep.subr.mxu0 0.0
    %232 = vmatpush1.msra.mxu0 0.0
    %233 = vmatprep.subr.mxu0 0.0
    %234 = vmatpush1.msra.mxu0 0.0
    %235 = vmatprep.subr.mxu0 0.0
    %236 = vmatpush1.msra.mxu0 0.0
    %237 = vmatprep.subr.mxu0 0.0
    %238 = vmatpush1.msra.mxu0 0.0
    %239 = vmatprep.subr.mxu0 0.0
    %240 = vmatpush1.msra.mxu0 0.0
    %241 = vmatprep.subr.mxu0 0.0
    %242 = vmatpush1.msra.mxu0 0.0
    %243 = vmatprep.subr.mxu0 0.0
    %244 = vmatpush1.msra.mxu0 0.0
    %245 = vmatprep.subr.mxu0 0.0
    %246 = vmatpush1.msra.mxu0 0.0
    %247 = vmatprep.subr.mxu0 0.0
    %248 = vmatpush1.msra.mxu0 0.0
    %249 = vmatprep.subr.mxu0 0.0
    %250 = vmatpush1.msra.mxu0 0.0
    %251 = vmatprep.subr.mxu0 0.0
    %252 = vmatpush1.msra.mxu0 0.0
    %253 = vmatprep.subr.mxu0 0.0
    %254 = vmatpush1.msra.mxu0 0.0
    %255 = vmatprep.subr.mxu0 0.0
    %256 = vmatpush1.msra.mxu0 0.0
    %257 = vmatprep.mubr.f32.mxu0 0.0
    %258 = vmatmul.mubr.f32.gmra.mrb[0].mxu0 %v141
    %v259 = vpop.f32.mrb[0].mxu0
    %v260 = vadd.f32 %v58, %v259
    %v261 = vpop.f32.mrb[0].mxu0
    %v262 = vadd.f32 %v58, %v261
    %263 = vmatprep.mubr.f32.mxu0 0.0
    %264 = vmatmul.mubr.f32.gmra.mrb[0].mxu0 %v144
    %v265 = vpop.f32.mrb[0].mxu0
    %v266 = vadd.f32 %v63, %v265
    %v267 = vpop.f32.mrb[0].mxu0
    %v268 = vadd.f32 %v63, %v267
    %269 = vmatprep.mubr.f32.mxu0 0.0
    %270 = vmatmul.mubr.f32.gmra.mrb[0].mxu0 %v147
    %v271 = vpop.f32.mrb[0].mxu0
    %v272 = vadd.f32 %v68, %v271
    %v273 = vpop.f32.mrb[0].mxu0
    %v274 = vadd.f32 %v68, %v273
    %275 = vmatprep.mubr.f32.mxu0 0.0
    %276 = vmatmul.mubr.f32.gmra.mrb[0].mxu0 %v150
    %v277 = vpop.f32.mrb[0].mxu0
    %v278 = vadd.f32 %v73, %v277
    %v279 = vpop.f32.mrb[0].mxu0
    %v280 = vadd.f32 %v73, %v279
    %281 = vmatprep.mubr.f32.mxu0 0.0
    %282 = vmatmul.mubr.f32.gmra.mrb[0].mxu0 %v153
    %v283 = vpop.f32.mrb[0].mxu0
    %v284 = vadd.f32 %v78, %v283
    %v285 = vpop.f32.mrb[0].mxu0
    %v286 = vadd.f32 %v78, %v285
    %287 = vmatprep.mubr.f32.mxu0 0.0
    %288 = vmatmul.mubr.f32.gmra.mrb[0].mxu0 %v156
    %v289 = vpop.f32.mrb[0].mxu0
    %v290 = vadd.f32 %v83, %v289
    %v291 = vpop.f32.mrb[0].mxu0
    %v292 = vadd.f32 %v83, %v291
    %293 = vmatprep.mubr.f32.mxu0 0.0
    %294 = vmatmul.mubr.f32.gmra.mrb[0].mxu0 %v159
    %v295 = vpop.f32.mrb[0].mxu0
    %v296 = vadd.f32 %v88, %v295
    %v297 = vpop.f32.mrb[0].mxu0
    %v298 = vadd.f32 %v88, %v297
    %299 = vmatprep.mubr.f32.mxu0 0.0
    %300 = vmatmul.mubr.f32.gmra.mrb[0].mxu0 %v162
    %v301 = vpop.f32.mrb[0].mxu0
    %v302 = vadd.f32 %v93, %v301
    %v303 = vpop.f32.mrb[0].mxu0
    %v304 = vadd.f32 %v93, %v303
    %305 = vmatprep.mubr.f32.mxu0 0.0
    %306 = vmatmul.mubr.f32.gmra.mrb[0].mxu0 %v165
    %v307 = vpop.f32.mrb[0].mxu0
    %v308 = vadd.f32 %v98, %v307
    %v309 = vpop.f32.mrb[0].mxu0
    %v310 = vadd.f32 %v98, %v309
    %311 = vmatprep.mubr.f32.mxu0 0.0
    %312 = vmatmul.mubr.f32.gmra.mrb[0].mxu0 %v168
    %v313 = vpop.f32.mrb[0].mxu0
    %v314 = vadd.f32 %v103, %v313
    %v315 = vpop.f32.mrb[0].mxu0
    %v316 = vadd.f32 %v103, %v315
    %317 = vmatprep.mubr.f32.mxu0 0.0
    %318 = vmatmul.mubr.f32.gmra.mrb[0].mxu0 %v171
    %v319 = vpop.f32.mrb[0].mxu0
    %v320 = vadd.f32 %v108, %v319
    %v321 = vpop.f32.mrb[0].mxu0
    %v322 = vadd.f32 %v108, %v321
    %323 = vmatprep.mubr.f32.mxu0 0.0
    %324 = vmatmul.mubr.f32.gmra.mrb[0].mxu0 %v174
    %v325 = vpop.f32.mrb[0].mxu0
    %v326 = vadd.f32 %v113, %v325
    %v327 = vpop.f32.mrb[0].mxu0
    %v328 = vadd.f32 %v113, %v327
    %329 = vmatprep.mubr.f32.mxu0 0.0
    %330 = vmatmul.mubr.f32.gmra.mrb[0].mxu0 %v177
    %v331 = vpop.f32.mrb[0].mxu0
    %v332 = vadd.f32 %v118, %v331
    %v333 = vpop.f32.mrb[0].mxu0
    %v334 = vadd.f32 %v118, %v333
    %335 = vmatprep.mubr.f32.mxu0 0.0
    %336 = vmatmul.mubr.f32.gmra.mrb[0].mxu0 %v180
    %v337 = vpop.f32.mrb[0].mxu0
    %v338 = vadd.f32 %v123, %v337
    %v339 = vpop.f32.mrb[0].mxu0
    %v340 = vadd.f32 %v123, %v339
    %341 = vmatprep.mubr.f32.mxu0 0.0
    %342 = vmatmul.mubr.f32.gmra.mrb[0].mxu0 %v183
    %v343 = vpop.f32.mrb[0].mxu0
    %v344 = vadd.f32 %v128, %v343
    %v345 = vpop.f32.mrb[0].mxu0
    %v346 = vadd.f32 %v128, %v345
    %347 = vmatprep.mubr.f32.mxu0 0.0
    %348 = vmatmul.mubr.f32.gmra.mrb[0].mxu0 %v186
    %v349 = vpop.f32.mrb[0].mxu0
    %v350 = vadd.f32 %v133, %v349
    %v351 = vpop.f32.mrb[0].mxu0
    %v352 = vadd.f32 %v133, %v351
    %353 = vdwg.mxu0
    %v354 = vmax.f32 %v260, 0.0
    %v355 = vmax.f32 %v262, 0.0
    %v356 = vmax.f32 %v266, 0.0
    %v357 = vmax.f32 %v268, 0.0
    %v358 = vmax.f32 %v272, 0.0
    %v359 = vmax.f32 %v274, 0.0
    %v360 = vmax.f32 %v278, 0.0
    %v361 = vmax.f32 %v280, 0.0
    %v362 = vmax.f32 %v284, 0.0
    %v363 = vmax.f32 %v286, 0.0
    %v364 = vmax.f32 %v290, 0.0
    %v365 = vmax.f32 %v292, 0.0
    %v366 = vmax.f32 %v296, 0.0
    %v367 = vmax.f32 %v298, 0.0
    %v368 = vmax.f32 %v302, 0.0
    %v369 = vmax.f32 %v304, 0.0
    %v370 = vmax.f32 %v308, 0.0
    %v371 = vmax.f32 %v310, 0.0
    %v372 = vmax.f32 %v314, 0.0
    %v373 = vmax.f32 %v316, 0.0
    %v374 = vmax.f32 %v320, 0.0
    %v375 = vmax.f32 %v322, 0.0
    %v376 = vmax.f32 %v326, 0.0
    %v377 = vmax.f32 %v328, 0.0
    %v378 = vmax.f32 %v332, 0.0
    %v379 = vmax.f32 %v334, 0.0
    %v380 = vmax.f32 %v338, 0.0
    %v381 = vmax.f32 %v340, 0.0
    %v382 = vmax.f32 %v344, 0.0
    %v383 = vmax.f32 %v346, 0.0
    %v384 = vmax.f32 %v350, 0.0
    %v385 = vmax.f32 %v352, 0.0
    %v386 = vstv %s135
    %387 = vmatprep.subr.mxu0 %v355
    %388 = vmatpush1.msra.mxu0 %v354
    %389 = vmatprep.subr.mxu0 %v357
    %390 = vmatpush1.msra.mxu0 %v356
    %391 = vmatprep.subr.mxu0 %v359
    %392 = vmatpush1.msra.mxu0 %v358
    %393 = vmatprep.subr.mxu0 %v361
    %394 = vmatpush1.msra.mxu0 %v360
    %395 = vmatprep.subr.mxu0 %v363
    %396 = vmatpush1.msra.mxu0 %v362
    %397 = vmatprep.subr.mxu0 %v365
    %398 = vmatpush1.msra.mxu0 %v364
    %399 = vmatprep.subr.mxu0 %v367
    %400 = vmatpush1.msra.mxu0 %v366
    %401 = vmatprep.subr.mxu0 %v369
    %402 = vmatpush1.msra.mxu0 %v368
    %403 = vmatprep.subr.mxu0 %v371
    %404 = vmatpush1.msra.mxu0 %v370
    %405 = vmatprep.subr.mxu0 %v373
    %406 = vmatpush1.msra.mxu0 %v372
    %407 = vmatprep.subr.mxu0 %v375
    %408 = vmatpush1.msra.mxu0 %v374
    %409 = vmatprep.subr.mxu0 %v377
    %410 = vmatpush1.msra.mxu0 %v376
    %411 = vmatprep.subr.mxu0 %v379
    %412 = vmatpush1.msra.mxu0 %v378
    %413 = vmatprep.subr.mxu0 %v381
    %414 = vmatpush1.msra.mxu0 %v380
    %415 = vmatprep.subr.mxu0 %v383
    %416 = vmatpush1.msra.mxu0 %v382
    %417 = vmatprep.subr.mxu0 %v385
    %418 = vmatpush1.msra.mxu0 %v384
    %419 = vmatprep.subr.mxu0 0.0
    %420 = vmatpush1.msra.mxu0 0.0
    %421 = vmatprep.subr.mxu0 0.0
    %422 = vmatpush1.msra.mxu0 0.0
    %423 = vmatprep.subr.mxu0 0.0
    %424 = vmatpush1.msra.mxu0 0.0
    %425 = vmatprep.subr.mxu0 0.0
    %426 = vmatpush1.msra.mxu0 0.0
    %427 = vmatprep.subr.mxu0 0.0
    %428 = vmatpush1.msra.mxu0 0.0
    %429 = vmatprep.subr.mxu0 0.0
    %430 = vmatpush1.msra.mxu0 0.0
    %431 = vmatprep.subr.mxu0 0.0
    %432 = vmatpush1.msra.mxu0 0.0
    %433 = vmatprep.subr.mxu0 0.0
    %434 = vmatpush1.msra.mxu0 0.0
    %435 = vmatprep.subr.mxu0 0.0
    %436 = vmatpush1.msra.mxu0 0.0
    %437 = vmatprep.subr.mxu0 0.0
    %438 = vmatpush1.msra.mxu0 0.0
    %439 = vmatprep.subr.mxu0 0.0
    %440 = vmatpush1.msra.mxu0 0.0
    %441 = vmatprep.subr.mxu0 0.0
    %442 = vmatpush1.msra.mxu0 0.0
    %443 = vmatprep.subr.mxu0 0.0
    %444 = vmatpush1.msra.mxu0 0.0
    %445 = vmatprep.subr.mxu0 0.0
    %446 = vmatpush1.msra.mxu0 0.0
    %447 = vmatprep.subr.mxu0 0.0
    %448 = vmatpush1.msra.mxu0 0.0
    %449 = vmatprep.subr.mxu0 0.0
    %450 = vmatpush1.msra.mxu0 0.0
    %451 = vmatprep.mubr.f32.mxu0 0.0
    %452 = vmatmul.mubr.f32.gmra.mrb[0].mxu0 %v38
    %v453 = vpop.f32.mrb[0].mxu0
    %v454 = vadd.f32 %v386, %v453
    %v455 = vpop.f32.mrb[0].mxu0
    %v456 = vadd.f32 %v386, %v455
    %457 = vdwg.mxu0
    %v460 = vcombine.low %v454, %v456
    %v462 = vunpack.c.l.s4 1966171168
    %v463 = vunpack.c.0.s8 %v462
    %v464 = vlaneseq
    %v465 = vshrl.u32 %v464, 7
    %v466 = vsub.s32 %v463, %v465
    %v467 = vrot.slane %v460, %v466
    %v469 = vunpack.c.l.s4 1966171168
    %v470 = vunpack.c.0.s8 %v469
    %v471 = vlaneseq
    %v472 = vshrl.u32 %v471, 7
    %v473 = vsub.s32 %v470, %v472
    %v474 = vrot.slane %v467, %v473
    %v476 = vlaneseq
    %vm477 = vcmp.ge.s32.totalorder %v476, 0
    %vm478 = vcmp.lt.s32.totalorder %v476, 256
    %vm479 = vmand %vm477, %vm478
    %480 = vst.msk [vmem:[#allocation3] sm:$0x3] %vm479, %v474
    // Predicated region
    $region22: #{tpu_custom_call.1} parent=1 // pred_check
      _
    $region23: #{tpu_custom_call.1} parent=1 // pred_check_branch
      %482 = sbr.rel (0) target = $region25
    $region24: #{tpu_custom_call.1} parent=1 // pred_region
      %s484 = ssub.s32 32, 32
      %485 = vsyncadd [#allocation4], %s484
      %s487 = sshll.u32 [#allocation3], 4
      %s488 = int_to_ptr.vmem [resolvable:$true] %s487
      %490 = dma.vmem_to_hbm [thread:$0]  %s488, 32, %s5, [#allocation4]
    $region25: #{tpu_custom_call.1} parent=1 // pred_fallthru
      _
    // Predicated region
    $region26: #{tpu_custom_call.1} parent=1 // pred_check
      _
    $region27: #{tpu_custom_call.1} parent=1 // pred_check_branch
      %492 = sbr.rel (0) target = $region29
    $region28: #{tpu_custom_call.1} parent=1 // pred_region
      %493 = dma.done [#allocation4], 32
    $region29: #{tpu_custom_call.1} parent=1 // pred_fallthru
      _
    %494 = vsyncpa [#allocation4], 1

</llo_original>
